<compile_context>
chip_gen: v6e
topology: v6e:2x2x1
jax: 0.10.0
libtpu: 0.0.40
codegen_flags: <defaults>
</compile_context>

<pallas_src>
import functools
import math

import numpy as np
import jax
import jax.numpy as jnp
from jax.experimental import pallas as pl
from jax.experimental.pallas import tpu as pltpu

_L, _CIN, _K, _COUT = 16, 5, 3, 16      # fixed by the module architecture
_CP = 128                               # lane-dense width of the per-row qkv slab


def _round_up(v, m):
    return ((v + m - 1) // m) * m


def _cdiv(a, b):
    return (a + b - 1) // b


# --------------------------- Kernel 1: instance -> [q|k|v] ---------------------------

def _instance_qkv_kernel(x_ref, ra_ref, wc_ref, bc_ref, w1_ref, b1_ref,
                         w3_ref, b3_ref, w2a_ref, w2b_ref, b2_ref, out_ref):
    half = wc_ref.shape[1] // 2                                      # 128 pooled lanes
    x = x_ref[...]                                                   # (bt, 80) lane-dense

    # Conv1d(5->16, k=3, pad=1) + ReLU as ONE banded matmul; output lanes are
    # (parity, c_out, t//2) so the 2x max-pool is a vreg-aligned half/half max.
    conv = jnp.maximum(
        jnp.dot(x, wc_ref[...], preferred_element_type=jnp.float32) + bc_ref[...],
        0.0)                                                         # (bt, 256)
    pooled = jnp.maximum(conv[:, :half], conv[:, half:])             # (bt, 128)

    h1 = jnp.maximum(
        jnp.dot(pooled, w1_ref[...], preferred_element_type=jnp.float32) + b1_ref[...],
        0.0)                                                         # (bt, H/2)
    h3 = jnp.maximum(ra_ref[...] * w3_ref[...] + b3_ref[...], 0.0)   # fc3: VPU broadcast

    # fc2 fused with the MHA in-projection -> per-row [q | k | v | zeros] slab.
    out_ref[...] = (jnp.dot(h1, w2a_ref[...], preferred_element_type=jnp.float32)
                    + jnp.dot(h3, w2b_ref[...], preferred_element_type=jnp.float32)
                    + b2_ref[...]).astype(out_ref.dtype)             # (bt, 128)


def _conv_pool_weights(conv_w, conv_b):
    """Fold Conv1d(5->16, k=3, pad=1) into one banded (80, 256) matrix whose output
    lanes are (parity, c_out, t//2): MaxPool1d(2,2) becomes max(cols[:128], cols[128:])
    and the pooled lane order equals PyTorch's fc1 flatten order (c*8 + t//2)."""
    L, Cin, K, Cout, half = _L, _CIN, _K, _COUT, _L // 2
    t_in = np.arange(L).reshape(L, 1, 1, 1, 1)
    c_in = np.arange(Cin).reshape(1, Cin, 1, 1, 1)
    par = np.arange(2).reshape(1, 1, 2, 1, 1)
    c_out = np.arange(Cout).reshape(1, 1, 1, Cout, 1)
    t8 = np.arange(half).reshape(1, 1, 1, 1, half)
    kk = t_in - (2 * t8 + par) + 1                       # kernel tap index
    valid = jnp.asarray((kk >= 0) & (kk < K))
    w_g = conv_w[c_out, c_in, np.clip(kk, 0, K - 1)]     # (L, Cin, 2, Cout, half)
    wc = jnp.where(valid, w_g, 0.0).reshape(L * Cin, 2 * Cout * half)
    bc = jnp.broadcast_to(conv_b.reshape(1, Cout, 1), (2, Cout, half))
    return wc.astype(jnp.float32), bc.reshape(1, 2 * Cout * half).astype(jnp.float32)


def _instance_qkv_pallas(x2, ra, params, hidden_dim, num_classes,
                         min_rows, row_multiple, b_tile):
    """x2: (B, 80) lane-dense instances, ra: (B, 1).
    Returns (rows, 128) float32 with [q | k | v | zeros] per instance row."""
    B, F = x2.shape
    H2 = hidden_dim // 2
    C = num_classes
    assert 3 * C <= _CP, "q|k|v slab must fit in 128 lanes"

    bt = min(_round_up(b_tile, 8), _round_up(B, 8))
    grid = _cdiv(B, bt)                                   # ragged last block: no input pad
    rows = _round_up(max(grid * bt, min_rows), row_multiple)

    wc, bc = _conv_pool_weights(params["conv_w"], params["conv_b"])
    w1 = params["fc1_w"].T.astype(jnp.float32)            # (128, H/2): lane order matches
    b1 = params["fc1_b"].reshape(1, H2).astype(jnp.float32)
    w3 = params["fc3_w"].T.astype(jnp.float32)            # (1, H/2)
    b3 = params["fc3_b"].reshape(1, H2).astype(jnp.float32)

    # Fuse fc2 with the MHA in_proj (both linear): emit [q|k|v] directly.
    Wi, Bi = params["attn_in_w"], params["attn_in_b"]
    W2, b2 = params["fc2_w"].T, params["fc2_b"]            # (H, C), (C,)
    blocks_w, blocks_b = [], []
    for h in range(3):
        Wp = Wi[h * C:(h + 1) * C].T                       # (C, C)
        bp = Bi[h * C:(h + 1) * C]
        blocks_w.append(W2 @ Wp)
        blocks_b.append(b2 @ Wp + bp)
    Wqkv = jnp.concatenate(blocks_w, axis=1)               # (H, 3C)
    bqkv = jnp.concatenate(blocks_b)                       # (3C,)
    w2a = jnp.zeros((H2, _CP), jnp.float32).at[:, :3 * C].set(Wqkv[:H2])
    w2b = jnp.zeros((H2, _CP), jnp.float32).at[:, :3 * C].set(Wqkv[H2:])
    b2p = jnp.zeros((1, _CP), jnp.float32).at[0, :3 * C].set(bqkv)

    const = lambda s: pl.BlockSpec(s, lambda i: (0, 0))
    return pl.pallas_call(
        _instance_qkv_kernel,
        out_shape=jax.ShapeDtypeStruct((rows, _CP), jnp.float32),
        grid=(grid,),
        in_specs=[
            pl.BlockSpec((bt, F), lambda i: (i, 0)),       # lane-dense instance rows
            pl.BlockSpec((bt, 1), lambda i: (i, 0)),       # RA
            const(wc.shape), const(bc.shape),              # conv-as-matmul (resident)
            const(w1.shape), const(b1.shape),              # fc1
            const(w3.shape), const(b3.shape),              # fc3 row / bias
            const(w2a.shape), const(w2b.shape), const(b2p.shape),  # fused fc2+in_proj
        ],
        out_specs=pl.BlockSpec((bt, _CP), lambda i: (i, 0)),
        compiler_params=pltpu.CompilerParams(dimension_semantics=("parallel",)),
    )(x2, ra, wc, bc, w1, b1, w3, b3, w2a, w2b, b2p)


# ---------------------- Kernel 2: per-bag attention + fc + mean ----------------------

def _attention_head_kernel(qkv_ref, wof_ref, bof_ref, logits_ref, attnw_ref,
                           *, num_heads, num_classes):
    TB, N, _ = qkv_ref.shape
    C = num_classes
    d = C // num_heads
    scale = 1.0 / math.sqrt(d)

    qkv = qkv_ref[...]                                    # (TB, N, 128)
    q = qkv[:, :, 0:C] * scale
    k = qkv[:, :, C:2 * C]
    v = qkv[:, :, 2 * C:3 * C]

    if d == 1:
        # head_dim == 1: heads live on the lane axis -> attention is pure VPU
        # broadcast math (no per-head loop, no K=1 / N=1 MXU matmuls).
        s = q[:, :, None, :] * k[:, None, :, :]           # (TB, Nq, Nk, H)
    else:
        q5 = q.reshape(TB, N, 1, num_heads, d)
        k5 = k.reshape(TB, 1, N, num_heads, d)
        s = jnp.sum(q5 * k5, axis=-1)                     # (TB, Nq, Nk, H)

    s = s - jnp.max(s, axis=2, keepdims=True)
    e = jnp.exp(s)
    a = e / jnp.sum(e, axis=2, keepdims=True)             # softmax over the key axis

    if d == 1:
        attn_out = jnp.sum(a * v[:, None, :, :], axis=2)  # (TB, N, C)
    else:
        v5 = v.reshape(TB, 1, N, num_heads, d)
        attn_out = jnp.sum(a[..., None] * v5, axis=2).reshape(TB, N, C)

    # mean over instances (linear) first, then the combined out_proj @ fc map.
    pooled = jnp.mean(attn_out, axis=1)                   # (TB, C)
    logits_ref[...] = (jnp.dot(pooled, wof_ref[...], preferred_element_type=jnp.float32)
                       + bof_ref[...]).astype(logits_ref.dtype)
    attnw_ref[...] = jnp.mean(a, axis=-1).astype(attnw_ref.dtype)   # head-averaged weights


def _attention_head_pallas(qkv_rows, params, num_classes, num_heads,
                           n_bags, n_inst, tb):
    C = num_classes
    rows = qkv_rows.shape[0]
    qkv3 = qkv_rows.reshape(rows // n_inst, n_inst, _CP)   # free leading-dim split
    grid = _cdiv(n_bags, tb)
    bags_pad = grid * tb
    assert bags_pad * n_inst <= rows

    # out_proj and the final fc are back-to-back linear maps -> one (C, C) matrix.
    Wo, bo = params["attn_out_w"].T, params["attn_out_b"]
    Wf, bf = params["fc_w"].T, params["fc_b"]
    wof = (Wo @ Wf).astype(jnp.float32)
    bof = (bo @ Wf + bf).reshape(1, C).astype(jnp.float32)

    const = lambda s: pl.BlockSpec(s, lambda g: (0, 0))
    logits, attnw = pl.pallas_call(
        functools.partial(_attention_head_kernel, num_heads=num_heads, num_classes=C),
        out_shape=(jax.ShapeDtypeStruct((bags_pad, C), jnp.float32),
                   jax.ShapeDtypeStruct((bags_pad, n_inst, n_inst), jnp.float32)),
        grid=(grid,),
        in_specs=[pl.BlockSpec((tb, n_inst, _CP), lambda g: (g, 0, 0)),
                  const((C, C)), const((1, C))],
        out_specs=(pl.BlockSpec((tb, C), lambda g: (g, 0)),
                   pl.BlockSpec((tb, n_inst, n_inst), lambda g: (g, 0, 0))),
        compiler_params=pltpu.CompilerParams(dimension_semantics=("parallel",)),
    )(qkv3, wof, bof)
    return logits[:n_bags], attnw[:n_bags]


# --------------------------------- Full forward ---------------------------------

def self_attention_mil_forward(x, RA, params, hidden_dim, num_classes,
                               num_heads=7, b_tile=512, bag_tile=64):
    b, N, L, Cin = x.shape
    assert (L, Cin) == (_L, _CIN)
    assert num_classes % num_heads == 0, "embed_dim must be divisible by num_heads"
    assert bag_tile % 8 == 0
    B = b * N
    x2 = x.reshape(B, L * Cin).astype(jnp.float32)        # lane-dense (B, 80) instances
    ra = RA.reshape(B, 1).astype(jnp.float32)             # RA.view(B*k, -1)

    tb = b if b <= bag_tile else bag_tile                  # bags per kernel-2 step
    bags_pad = _cdiv(b, tb) * tb

    qkv = _instance_qkv_pallas(x2, ra, params, hidden_dim, num_classes,
                               min_rows=bags_pad * N, row_multiple=N, b_tile=b_tile)
    return _attention_head_pallas(qkv, params, num_classes, num_heads,
                                  n_bags=b, n_inst=N, tb=tb)


# ----------------------------------- Params -----------------------------------

def init_params(key, hidden_dim, num_classes):
    """Deterministic synthetic params in PyTorch-convention shapes."""
    H2 = hidden_dim // 2
    C = num_classes
    ks = jax.random.split(key, 14)

    def u(k, shape, fan_in):
        bound = 1.0 / math.sqrt(fan_in)
        return jax.random.uniform(k, shape, jnp.float32, -bound, bound)

    return {
        "conv_w": u(ks[0], (16, 5, 3), 5 * 3),           # Conv1d(5, 16, k=3)
        "conv_b": u(ks[1], (16,), 5 * 3),
        "fc1_w": u(ks[2], (H2, 16 * 8), 16 * 8),         # Linear(128, H/2)
        "fc1_b": u(ks[3], (H2,), 16 * 8),
        "fc3_w": u(ks[4], (H2, 1), 1),                   # Linear(1, H/2)
        "fc3_b": u(ks[5], (H2,), 1),
        "fc2_w": u(ks[6], (C, hidden_dim), hidden_dim),  # Linear(H, C)
        "fc2_b": u(ks[7], (C,), hidden_dim),
        "attn_in_w": u(ks[8], (3 * C, C), C),            # MHA packed in_proj
        "attn_in_b": u(ks[9], (3 * C,), C),
        "attn_out_w": u(ks[10], (C, C), C),              # MHA out_proj
        "attn_out_b": u(ks[11], (C,), C),
        "fc_w": u(ks[12], (C, C), C),                    # final Linear(C, C)
        "fc_b": u(ks[13], (C,), C),
    }


# ---------------------------- Pure-JAX reference ----------------------------

def _reference_instance(x, ra, params):
    b, N, L, Cin = x.shape
    B = b * N
    xt = jnp.transpose(x, (0, 1, 3, 2)).reshape(B, Cin, L)            # NCL
    xpad = jnp.pad(xt, ((0, 0), (0, 0), (1, 1)))
    win = jnp.stack([xpad[:, :, s:s + L] for s in range(3)], axis=-1)
    conv = jnp.einsum("bctk,ock->bot", win, params["conv_w"]) \
        + params["conv_b"][None, :, None]
    conv = jnp.maximum(conv, 0.0)
    pooled = conv.reshape(B, conv.shape[1], L // 2, 2).max(axis=-1)
    flat = pooled.reshape(B, conv.shape[1] * (L // 2))
    h1 = flat @ params["fc1_w"].T + params["fc1_b"]
    h3 = ra @ params["fc3_w"].T + params["fc3_b"]
    h = jnp.maximum(jnp.concatenate([h1, h3], axis=1), 0.0)
    out = h @ params["fc2_w"].T + params["fc2_b"]
    return out.reshape(b, N, -1)


def reference_forward(x, RA, params, hidden_dim, num_classes, num_heads=7):
    b, N = x.shape[0], x.shape[1]
    C, H = num_classes, num_heads
    d = C // H
    ra = RA.reshape(b * N, 1)
    inst = _reference_instance(x, ra, params)                         # (b, N, C)

    Wi, Bi = params["attn_in_w"], params["attn_in_b"]
    q = inst @ Wi[:C].T + Bi[:C]
    k = inst @ Wi[C:2 * C].T + Bi[C:2 * C]
    v = inst @ Wi[2 * C:].T + Bi[2 * C:]
    qh, kh, vh = (t.reshape(b, N, H, d) for t in (q, k, v))
    s = jnp.einsum("bqhd,bkhd->bhqk", qh, kh) / math.sqrt(d)
    a = jax.nn.softmax(s, axis=-1)                                    # (b, H, N, N)
    o = jnp.einsum("bhqk,bkhd->bqhd", a, vh).reshape(b, N, C)
    o = o @ params["attn_out_w"].T + params["attn_out_b"]
    weighted = o @ params["fc_w"].T + params["fc_b"]
    bag_logits = weighted.mean(axis=1)
    attn_w = a.mean(axis=1)
    return bag_logits, attn_w


if __name__ == "__main__":
    hidden_dim, num_classes, num_heads = 32, 7, 7    # embed_dim divisible by heads
    b, N = 2, 4
    key = jax.random.PRNGKey(0)
    kx, kra, kp = jax.random.split(key, 3)

    x = jax.random.normal(kx, (b, N, 16, 5), jnp.float32)
    RA = jax.random.normal(kra, (b, N, 1), jnp.float32)
    params = init_params(kp, hidden_dim, num_classes)

    bag_logits, attn_w = self_attention_mil_forward(
        x, RA, params, hidden_dim, num_classes, num_heads)
    bag_logits, attn_w = jax.block_until_ready((bag_logits, attn_w))

    ref_logits, ref_attn = reference_forward(x, RA, params, hidden_dim,
                                             num_classes, num_heads)

    assert bag_logits.shape == (b, num_classes), bag_logits.shape
    assert attn_w.shape == (b, N, N), attn_w.shape
    assert jnp.allclose(bag_logits, ref_logits, rtol=1e-2, atol=1e-2), \
        float(jnp.max(jnp.abs(bag_logits - ref_logits)))
    assert jnp.allclose(attn_w, ref_attn, rtol=1e-2, atol=1e-2), \
        float(jnp.max(jnp.abs(attn_w - ref_attn)))
    print("KERNEL_OK")
</pallas_src>

<mosaic_0001>
module attributes {stable_mosaic.version = 11 : i64} {
  func.func @_instance_qkv_kernel(%arg0: i32, %arg1: memref<8x80xf32, #tpu.memory_space<vmem>>, %arg2: memref<8x1xf32, #tpu.memory_space<vmem>>, %arg3: memref<80x256xf32, #tpu.memory_space<vmem>>, %arg4: memref<1x256xf32, #tpu.memory_space<vmem>>, %arg5: memref<128x16xf32, #tpu.memory_space<vmem>>, %arg6: memref<1x16xf32, #tpu.memory_space<vmem>>, %arg7: memref<1x16xf32, #tpu.memory_space<vmem>>, %arg8: memref<1x16xf32, #tpu.memory_space<vmem>>, %arg9: memref<16x128xf32, #tpu.memory_space<vmem>>, %arg10: memref<16x128xf32, #tpu.memory_space<vmem>>, %arg11: memref<1x128xf32, #tpu.memory_space<vmem>>, %arg12: memref<8x128xf32, #tpu.memory_space<vmem>>) attributes {dimension_semantics = [#tpu.dimension_semantics<parallel>], iteration_bounds = array<i64: 1>, scalar_prefetch = 0 : i64, scratch_operands = 0 : i64, tpu.core_type = #tpu.core_type<tc>, window_params = [{transform_indices = @transform_0, window_bounds = array<i64: 8, 80>}, {transform_indices = @transform_1, window_bounds = array<i64: 8, 1>}, {pipeline_mode = #tpu.pipeline_mode<synchronous>, transform_indices = @transform_2, window_bounds = array<i64: 80, 256>}, {pipeline_mode = #tpu.pipeline_mode<synchronous>, transform_indices = @transform_3, window_bounds = array<i64: 1, 256>}, {pipeline_mode = #tpu.pipeline_mode<synchronous>, transform_indices = @transform_4, window_bounds = array<i64: 128, 16>}, {pipeline_mode = #tpu.pipeline_mode<synchronous>, transform_indices = @transform_5, window_bounds = array<i64: 1, 16>}, {pipeline_mode = #tpu.pipeline_mode<synchronous>, transform_indices = @transform_6, window_bounds = array<i64: 1, 16>}, {pipeline_mode = #tpu.pipeline_mode<synchronous>, transform_indices = @transform_7, window_bounds = array<i64: 1, 16>}, {pipeline_mode = #tpu.pipeline_mode<synchronous>, transform_indices = @transform_8, window_bounds = array<i64: 16, 128>}, {pipeline_mode = #tpu.pipeline_mode<synchronous>, transform_indices = @transform_9, window_bounds = array<i64: 16, 128>}, {pipeline_mode = #tpu.pipeline_mode<synchronous>, transform_indices = @transform_10, window_bounds = array<i64: 1, 128>}, {transform_indices = @transform_11, window_bounds = array<i64: 8, 128>}]} {
    %c0 = arith.constant 0 : index
    %c0_0 = arith.constant 0 : index
    %0 = vector.load %arg1[%c0, %c0_0] : memref<8x80xf32, #tpu.memory_space<vmem>>, vector<8x80xf32>
    %c0_1 = arith.constant 0 : index
    %c0_2 = arith.constant 0 : index
    %1 = vector.load %arg3[%c0_1, %c0_2] : memref<80x256xf32, #tpu.memory_space<vmem>>, vector<80x256xf32>
    %cst = arith.constant dense<0.000000e+00> : vector<8x256xf32>
    %2 = tpu.matmul %0, %1, %cst {dimension_numbers = #tpu.dot_dimension_numbers<[1], [0], [0], [1], [0, 0, 1, 1], [], []>} : vector<8x80xf32>, vector<80x256xf32>, vector<8x256xf32> -> vector<8x256xf32>
    %c0_3 = arith.constant 0 : index
    %c0_4 = arith.constant 0 : index
    %3 = vector.load %arg4[%c0_3, %c0_4] : memref<1x256xf32, #tpu.memory_space<vmem>>, vector<1x256xf32>
    %4 = vector.broadcast %3 : vector<1x256xf32> to vector<8x256xf32>
    %5 = arith.addf %2, %4 : vector<8x256xf32>
    %cst_5 = arith.constant 0.000000e+00 : f32
    %6 = vector.broadcast %cst_5 : f32 to vector<8x256xf32>
    %7 = arith.maximumf %5, %6 : vector<8x256xf32>
    %8 = vector.extract_strided_slice %7 {offsets = [0, 0], sizes = [8, 128], strides = [1, 1]} : vector<8x256xf32> to vector<8x128xf32>
    %9 = vector.extract_strided_slice %7 {offsets = [0, 128], sizes = [8, 128], strides = [1, 1]} : vector<8x256xf32> to vector<8x128xf32>
    %10 = arith.maximumf %8, %9 : vector<8x128xf32>
    %c0_6 = arith.constant 0 : index
    %c0_7 = arith.constant 0 : index
    %11 = vector.load %arg5[%c0_6, %c0_7] : memref<128x16xf32, #tpu.memory_space<vmem>>, vector<128x16xf32>
    %cst_8 = arith.constant dense<0.000000e+00> : vector<8x16xf32>
    %12 = tpu.matmul %10, %11, %cst_8 {dimension_numbers = #tpu.dot_dimension_numbers<[1], [0], [0], [1], [0, 0, 1, 1], [], []>} : vector<8x128xf32>, vector<128x16xf32>, vector<8x16xf32> -> vector<8x16xf32>
    %c0_9 = arith.constant 0 : index
    %c0_10 = arith.constant 0 : index
    %13 = vector.load %arg6[%c0_9, %c0_10] : memref<1x16xf32, #tpu.memory_space<vmem>>, vector<1x16xf32>
    %14 = vector.broadcast %13 : vector<1x16xf32> to vector<8x16xf32>
    %15 = arith.addf %12, %14 : vector<8x16xf32>
    %cst_11 = arith.constant 0.000000e+00 : f32
    %16 = vector.broadcast %cst_11 : f32 to vector<8x16xf32>
    %17 = arith.maximumf %15, %16 : vector<8x16xf32>
    %c0_12 = arith.constant 0 : index
    %c0_13 = arith.constant 0 : index
    %18 = vector.load %arg2[%c0_12, %c0_13] : memref<8x1xf32, #tpu.memory_space<vmem>>, vector<8x1xf32>
    %c0_14 = arith.constant 0 : index
    %c0_15 = arith.constant 0 : index
    %19 = vector.load %arg7[%c0_14, %c0_15] : memref<1x16xf32, #tpu.memory_space<vmem>>, vector<1x16xf32>
    %20 = vector.broadcast %18 : vector<8x1xf32> to vector<8x16xf32>
    %21 = vector.broadcast %19 : vector<1x16xf32> to vector<8x16xf32>
    %22 = arith.mulf %20, %21 : vector<8x16xf32>
    %c0_16 = arith.constant 0 : index
    %c0_17 = arith.constant 0 : index
    %23 = vector.load %arg8[%c0_16, %c0_17] : memref<1x16xf32, #tpu.memory_space<vmem>>, vector<1x16xf32>
    %24 = vector.broadcast %23 : vector<1x16xf32> to vector<8x16xf32>
    %25 = arith.addf %22, %24 : vector<8x16xf32>
    %cst_18 = arith.constant 0.000000e+00 : f32
    %26 = vector.broadcast %cst_18 : f32 to vector<8x16xf32>
    %27 = arith.maximumf %25, %26 : vector<8x16xf32>
    %c0_19 = arith.constant 0 : index
    %c0_20 = arith.constant 0 : index
    %28 = vector.load %arg9[%c0_19, %c0_20] : memref<16x128xf32, #tpu.memory_space<vmem>>, vector<16x128xf32>
    %cst_21 = arith.constant dense<0.000000e+00> : vector<8x128xf32>
    %29 = tpu.matmul %17, %28, %cst_21 {dimension_numbers = #tpu.dot_dimension_numbers<[1], [0], [0], [1], [0, 0, 1, 1], [], []>} : vector<8x16xf32>, vector<16x128xf32>, vector<8x128xf32> -> vector<8x128xf32>
    %c0_22 = arith.constant 0 : index
    %c0_23 = arith.constant 0 : index
    %30 = vector.load %arg10[%c0_22, %c0_23] : memref<16x128xf32, #tpu.memory_space<vmem>>, vector<16x128xf32>
    %cst_24 = arith.constant dense<0.000000e+00> : vector<8x128xf32>
    %31 = tpu.matmul %27, %30, %cst_24 {dimension_numbers = #tpu.dot_dimension_numbers<[1], [0], [0], [1], [0, 0, 1, 1], [], []>} : vector<8x16xf32>, vector<16x128xf32>, vector<8x128xf32> -> vector<8x128xf32>
    %32 = arith.addf %29, %31 : vector<8x128xf32>
    %c0_25 = arith.constant 0 : index
    %c0_26 = arith.constant 0 : index
    %33 = vector.load %arg11[%c0_25, %c0_26] : memref<1x128xf32, #tpu.memory_space<vmem>>, vector<1x128xf32>
    %34 = vector.broadcast %33 : vector<1x128xf32> to vector<8x128xf32>
    %35 = arith.addf %32, %34 : vector<8x128xf32>
    %c0_27 = arith.constant 0 : index
    %c0_28 = arith.constant 0 : index
    %36 = vector.load %arg12[%c0_27, %c0_28] : memref<8x128xf32, #tpu.memory_space<vmem>>, vector<8x128xf32>
    tpu.vector_store %arg12[%c0_27, %c0_28], %35 {strides = array<i32>} : memref<8x128xf32, #tpu.memory_space<vmem>>, vector<8x128xf32>,
    return
  }
  func.func @transform_0(%arg0: i32) -> (i32, i32) {
    %c0_i32 = arith.constant 0 : i32
    %c0_i32_0 = arith.constant 0 : i32
    return %arg0, %c0_i32 : i32, i32
  }
  func.func @transform_1(%arg0: i32) -> (i32, i32) {
    %c0_i32 = arith.constant 0 : i32
    %c0_i32_0 = arith.constant 0 : i32
    return %arg0, %c0_i32 : i32, i32
  }
  func.func @transform_2(%arg0: i32) -> (i32, i32) {
    %c0_i32 = arith.constant 0 : i32
    %c0_i32_0 = arith.constant 0 : i32
    %c0_i32_1 = arith.constant 0 : i32
    return %c0_i32, %c0_i32_0 : i32, i32
  }
  func.func @transform_3(%arg0: i32) -> (i32, i32) {
    %c0_i32 = arith.constant 0 : i32
    %c0_i32_0 = arith.constant 0 : i32
    %c0_i32_1 = arith.constant 0 : i32
    return %c0_i32, %c0_i32_0 : i32, i32
  }
  func.func @transform_4(%arg0: i32) -> (i32, i32) {
    %c0_i32 = arith.constant 0 : i32
    %c0_i32_0 = arith.constant 0 : i32
    %c0_i32_1 = arith.constant 0 : i32
    return %c0_i32, %c0_i32_0 : i32, i32
  }
  func.func @transform_5(%arg0: i32) -> (i32, i32) {
    %c0_i32 = arith.constant 0 : i32
    %c0_i32_0 = arith.constant 0 : i32
    %c0_i32_1 = arith.constant 0 : i32
    return %c0_i32, %c0_i32_0 : i32, i32
  }
  func.func @transform_6(%arg0: i32) -> (i32, i32) {
    %c0_i32 = arith.constant 0 : i32
    %c0_i32_0 = arith.constant 0 : i32
    %c0_i32_1 = arith.constant 0 : i32
    return %c0_i32, %c0_i32_0 : i32, i32
  }
  func.func @transform_7(%arg0: i32) -> (i32, i32) {
    %c0_i32 = arith.constant 0 : i32
    %c0_i32_0 = arith.constant 0 : i32
    %c0_i32_1 = arith.constant 0 : i32
    return %c0_i32, %c0_i32_0 : i32, i32
  }
  func.func @transform_8(%arg0: i32) -> (i32, i32) {
    %c0_i32 = arith.constant 0 : i32
    %c0_i32_0 = arith.constant 0 : i32
    %c0_i32_1 = arith.constant 0 : i32
    return %c0_i32, %c0_i32_0 : i32, i32
  }
  func.func @transform_9(%arg0: i32) -> (i32, i32) {
    %c0_i32 = arith.constant 0 : i32
    %c0_i32_0 = arith.constant 0 : i32
    %c0_i32_1 = arith.constant 0 : i32
    return %c0_i32, %c0_i32_0 : i32, i32
  }
  func.func @transform_10(%arg0: i32) -> (i32, i32) {
    %c0_i32 = arith.constant 0 : i32
    %c0_i32_0 = arith.constant 0 : i32
    %c0_i32_1 = arith.constant 0 : i32
    return %c0_i32, %c0_i32_0 : i32, i32
  }
  func.func @transform_11(%arg0: i32) -> (i32, i32) {
    %c0_i32 = arith.constant 0 : i32
    %c0_i32_0 = arith.constant 0 : i32
    return %arg0, %c0_i32 : i32, i32
  }
}

</mosaic_0001>

<llo_original>
// kernel: tpu_custom_call.1
$region0: #{tpu_custom_call.1}
  #allocation0 [shape = 'u32[]', space=smem, size = 0x4, offset = 0x4, fixed_abs, tag = 'smem constant byte address 0x4 - core index']
  #allocation1 [shape = 'u32[144,128]{1,0:T(1,128)}', space=vmem, size = 0x12000, scoped, tag = 'internal scratch']
  %s0 = inlined_call_operand.vmem [shape: f32[8,80], index: 0, kind: input, shape index: {}]
  %s1 = inlined_call_operand.vmem [shape: f32[8,1], index: 1, kind: input, shape index: {}]
  %s2 = inlined_call_operand.hbm [shape: f32[80,256], index: 2, kind: input, shape index: {}]
  %s3 = inlined_call_operand.vmem [shape: f32[1,256], index: 3, kind: input, shape index: {}]
  %s4 = inlined_call_operand.vmem [shape: f32[128,16], index: 4, kind: input, shape index: {}]
  %s5 = inlined_call_operand.vmem [shape: f32[1,16], index: 5, kind: input, shape index: {}]
  %s6 = inlined_call_operand.vmem [shape: f32[1,16], index: 6, kind: input, shape index: {}]
  %s7 = inlined_call_operand.vmem [shape: f32[1,16], index: 7, kind: input, shape index: {}]
  %s8 = inlined_call_operand.vmem [shape: f32[16,128], index: 8, kind: input, shape index: {}]
  %s9 = inlined_call_operand.vmem [shape: f32[16,128], index: 9, kind: input, shape index: {}]
  %s10 = inlined_call_operand.vmem [shape: f32[1,128], index: 10, kind: input, shape index: {}]
  %s11 = inlined_call_operand.hbm [shape: f32[8,128], index: 11, kind: output, shape index: {}]
  %s12 = sld [smem:[#allocation0]]
  $region58: #{tpu_custom_call.1} parent=0
    _
  %s14 = ssub.s32 1, %s12
  %s15 = scalar_select 0, %s14, %s12
  $region1: #{tpu_custom_call.1} parent=0
    #allocation2 [shape = 'u8[81920]{0}', space=vmem, size = 0x14000, scoped, tag = 'input window, operand 2, single buffered']
    #allocation3 [shape = 's32[1]{0}', space=sflag, size = 0x4, scoped, tag = 'scoped memory for tpu_custom_call.1']
    #allocation4 [shape = 's32[1]{0}', space=sflag, size = 0x4, scoped, tag = 'scoped memory for tpu_custom_call.1']
    #allocation5 [shape = 'u8[4096]{0}', space=vmem, size = 0x1000, scoped, tag = 'output window, operand 0, single buffered']
    %16 = vsyncpa [#allocation3], 0
    %17 = vsyncpa [#allocation4], 0
    // Predicated region
    $region2: #{tpu_custom_call.1} parent=1 // pred_check
      _
    $region3: #{tpu_custom_call.1} parent=1 // pred_check_branch
      %19 = sbr.rel (0) target = $region5
    $region4: #{tpu_custom_call.1} parent=1 // pred_region
      _
    $region5: #{tpu_custom_call.1} parent=1 // pred_fallthru
      _
    // Predicated region
    $region6: #{tpu_custom_call.1} parent=1 // pred_check
      _
    $region7: #{tpu_custom_call.1} parent=1 // pred_check_branch
      %21 = sbr.rel (0) target = $region9
    $region8: #{tpu_custom_call.1} parent=1 // pred_region
      _
    $region9: #{tpu_custom_call.1} parent=1 // pred_fallthru
      _
    // Predicated region
    $region10: #{tpu_custom_call.1} parent=1 // pred_check
      _
    $region11: #{tpu_custom_call.1} parent=1 // pred_check_branch
      %23 = sbr.rel (0) target = $region13
    $region12: #{tpu_custom_call.1} parent=1 // pred_region
      %s25 = ssub.s32 2560, 2560
      %26 = vsyncadd [#allocation3], %s25
      %s27 = sshll.u32 [#allocation2], 4
      %s28 = int_to_ptr.vmem [resolvable:$true] %s27
      %33 = dma.hbm_to_vmem [thread:$0]  %s2, 2560, %s28, [#allocation3], 256, 256, 16
    $region13: #{tpu_custom_call.1} parent=1 // pred_fallthru
      _
    // Predicated region
    $region14: #{tpu_custom_call.1} parent=1 // pred_check
      _
    $region15: #{tpu_custom_call.1} parent=1 // pred_check_branch
      %35 = sbr.rel (0) target = $region17
    $region16: #{tpu_custom_call.1} parent=1 // pred_region
      _
    $region17: #{tpu_custom_call.1} parent=1 // pred_fallthru
      _
    // Predicated region
    $region18: #{tpu_custom_call.1} parent=1 // pred_check
      _
    $region19: #{tpu_custom_call.1} parent=1 // pred_check_branch
      %37 = sbr.rel (0) target = $region21
    $region20: #{tpu_custom_call.1} parent=1 // pred_region
      _
    $region21: #{tpu_custom_call.1} parent=1 // pred_fallthru
      _
    // Predicated region
    $region22: #{tpu_custom_call.1} parent=1 // pred_check
      _
    $region23: #{tpu_custom_call.1} parent=1 // pred_check_branch
      %39 = sbr.rel (0) target = $region25
    $region24: #{tpu_custom_call.1} parent=1 // pred_region
      _
    $region25: #{tpu_custom_call.1} parent=1 // pred_fallthru
      _
    // Predicated region
    $region26: #{tpu_custom_call.1} parent=1 // pred_check
      _
    $region27: #{tpu_custom_call.1} parent=1 // pred_check_branch
      %41 = sbr.rel (0) target = $region29
    $region28: #{tpu_custom_call.1} parent=1 // pred_region
      _
    $region29: #{tpu_custom_call.1} parent=1 // pred_fallthru
      _
    // Predicated region
    $region30: #{tpu_custom_call.1} parent=1 // pred_check
      _
    $region31: #{tpu_custom_call.1} parent=1 // pred_check_branch
      %43 = sbr.rel (0) target = $region33
    $region32: #{tpu_custom_call.1} parent=1 // pred_region
      _
    $region33: #{tpu_custom_call.1} parent=1 // pred_fallthru
      _
    // Predicated region
    $region34: #{tpu_custom_call.1} parent=1 // pred_check
      _
    $region35: #{tpu_custom_call.1} parent=1 // pred_check_branch
      %45 = sbr.rel (0) target = $region37
    $region36: #{tpu_custom_call.1} parent=1 // pred_region
      _
    $region37: #{tpu_custom_call.1} parent=1 // pred_fallthru
      _
    // Predicated region
    $region38: #{tpu_custom_call.1} parent=1 // pred_check
      _
    $region39: #{tpu_custom_call.1} parent=1 // pred_check_branch
      %47 = sbr.rel (0) target = $region41
    $region40: #{tpu_custom_call.1} parent=1 // pred_region
      _
    $region41: #{tpu_custom_call.1} parent=1 // pred_fallthru
      _
    // Predicated region
    $region42: #{tpu_custom_call.1} parent=1 // pred_check
      _
    $region43: #{tpu_custom_call.1} parent=1 // pred_check_branch
      %49 = sbr.rel (0) target = $region45
    $region44: #{tpu_custom_call.1} parent=1 // pred_region
      _
    $region45: #{tpu_custom_call.1} parent=1 // pred_fallthru
      _
    // Predicated region
    $region46: #{tpu_custom_call.1} parent=1 // pred_check
      _
    $region47: #{tpu_custom_call.1} parent=1 // pred_check_branch
      %51 = sbr.rel (0) target = $region49
    $region48: #{tpu_custom_call.1} parent=1 // pred_region
      %52 = dma.done [#allocation3], 2560
    $region49: #{tpu_custom_call.1} parent=1 // pred_fallthru
      _
    %v53 = vld [vmem:[%s0] sm:$0xff]
    %v54 = vld [vmem:[#allocation2] sm:$0xff]
    %v55 = vld [vmem:[#allocation2 + $0x8] sm:$0xff]
    %v56 = vld [vmem:[#allocation2 + $0x10] sm:$0xff]
    %v57 = vld [vmem:[#allocation2 + $0x18] sm:$0xff]
    %v58 = vld [vmem:[#allocation2 + $0x20] sm:$0xff]
    %v59 = vld [vmem:[#allocation2 + $0x28] sm:$0xff]
    %v60 = vld [vmem:[#allocation2 + $0x30] sm:$0xff]
    %v61 = vld [vmem:[#allocation2 + $0x38] sm:$0xff]
    %v62 = vld [vmem:[#allocation2 + $0x40] sm:$0xff]
    %v63 = vld [vmem:[#allocation2 + $0x48] sm:$0xff]
    %v64 = vld [vmem:[#allocation2 + $0x50] sm:$0xff]
    %v65 = vld [vmem:[#allocation2 + $0x58] sm:$0xff]
    %v66 = vld [vmem:[#allocation2 + $0x60] sm:$0xff]
    %v67 = vld [vmem:[#allocation2 + $0x68] sm:$0xff]
    %v68 = vld [vmem:[#allocation2 + $0x70] sm:$0xff]
    %v69 = vld [vmem:[#allocation2 + $0x78] sm:$0xff]
    %v70 = vld [vmem:[#allocation2 + $0x80] sm:$0xff]
    %v71 = vld [vmem:[#allocation2 + $0x88] sm:$0xff]
    %v72 = vld [vmem:[#allocation2 + $0x90] sm:$0xff]
    %v73 = vld [vmem:[#allocation2 + $0x98] sm:$0xff]
    %v74 = vld [vmem:[%s3] sm:$0x3]
    %v76 = vlaneseq
    %v77 = vshrl.u32 %v76, 7
    %v78 = vsub.s32 0, %v77
    %v79 = vrot.slane %v74, %v78
    %v80 = vlaneseq
    %v81 = vshrl.u32 %v80, 7
    %v82 = vsub.s32 1, %v81
    %v83 = vrot.slane %v74, %v82
    %vm86 = vcmask 654336
    %v88 = vsel %vm86, %v53, 0
    %90 = vmatprep.subr.mxu0 0.0
    %91 = vmatpush1.msra.mxu0 0.0
    %92 = vmatprep.subr.mxu0 0.0
    %93 = vmatpush1.msra.mxu0 0.0
    %94 = vmatprep.subr.mxu0 0.0
    %95 = vmatpush1.msra.mxu0 0.0
    %96 = vmatprep.subr.mxu0 0.0
    %97 = vmatpush1.msra.mxu0 0.0
    %98 = vmatprep.subr.mxu0 0.0
    %99 = vmatpush1.msra.mxu0 0.0
    %100 = vmatprep.subr.mxu0 0.0
    %101 = vmatpush1.msra.mxu0 0.0
    %102 = vmatprep.subr.mxu0 %v73
    %103 = vmatpush1.msra.mxu0 %v72
    %104 = vmatprep.subr.mxu0 %v71
    %105 = vmatpush1.msra.mxu0 %v70
    %106 = vmatprep.subr.mxu0 %v69
    %107 = vmatpush1.msra.mxu0 %v68
    %108 = vmatprep.subr.mxu0 %v67
    %109 = vmatpush1.msra.mxu0 %v66
    %110 = vmatprep.subr.mxu0 %v65
    %111 = vmatpush1.msra.mxu0 %v64
    %112 = vmatprep.subr.mxu0 %v63
    %113 = vmatpush1.msra.mxu0 %v62
    %114 = vmatprep.subr.mxu0 %v61
    %115 = vmatpush1.msra.mxu0 %v60
    %116 = vmatprep.subr.mxu0 %v59
    %117 = vmatpush1.msra.mxu0 %v58
    %118 = vmatprep.subr.mxu0 %v57
    %119 = vmatpush1.msra.mxu0 %v56
    %120 = vmatprep.subr.mxu0 %v55
    %121 = vmatpush1.msra.mxu0 %v54
    %122 = vmatprep.subr.mxu0 0.0
    %123 = vmatpush2.msra.mxu0 0.0
    %124 = vmatprep.subr.mxu0 0.0
    %125 = vmatpush2.msra.mxu0 0.0
    %126 = vmatprep.subr.mxu0 0.0
    %127 = vmatpush2.msra.mxu0 0.0
    %128 = vmatprep.subr.mxu0 0.0
    %129 = vmatpush2.msra.mxu0 0.0
    %130 = vmatprep.subr.mxu0 0.0
    %131 = vmatpush2.msra.mxu0 0.0
    %132 = vmatprep.subr.mxu0 0.0
    %133 = vmatpush2.msra.mxu0 0.0
    %134 = vmatprep.subr.mxu0 0.0
    %135 = vmatpush2.msra.mxu0 0.0
    %136 = vmatprep.subr.mxu0 0.0
    %137 = vmatpush2.msra.mxu0 0.0
    %138 = vmatprep.subr.mxu0 0.0
    %139 = vmatpush2.msra.mxu0 0.0
    %140 = vmatprep.subr.mxu0 0.0
    %141 = vmatpush2.msra.mxu0 0.0
    %142 = vmatprep.subr.mxu0 0.0
    %143 = vmatpush2.msra.mxu0 0.0
    %144 = vmatprep.subr.mxu0 0.0
    %145 = vmatpush2.msra.mxu0 0.0
    %146 = vmatprep.subr.mxu0 0.0
    %147 = vmatpush2.msra.mxu0 0.0
    %148 = vmatprep.subr.mxu0 0.0
    %149 = vmatpush2.msra.mxu0 0.0
    %150 = vmatprep.subr.mxu0 0.0
    %151 = vmatpush2.msra.mxu0 0.0
    %152 = vmatprep.subr.mxu0 0.0
    %153 = vmatpush2.msra.mxu0 0.0
    %154 = vmatprep.mubr.f32.mxu0 0.0
    %155 = vmatmul.mubr.f32.gmra.mxu0 %v88
    %v156 = vpop.f32.mrf.mxu0
    %v157 = vadd.f32 %v79, %v156
    %v158 = vpop.f32.mrf.mxu0
    %v159 = vadd.f32 %v83, %v158
    %160 = vdwg.mxu0
    %v161 = vmax.f32 %v157, 0.0
    %v162 = vmax.f32 %v159, 0.0
    %v163 = vmax.f32 %v161, %v162
    %v164 = vld [vmem:[%s4] sm:$0xff]
    %v165 = vld [vmem:[%s4 + $0x8] sm:$0xff]
    %v166 = vld [vmem:[%s4 + $0x10] sm:$0xff]
    %v167 = vld [vmem:[%s4 + $0x18] sm:$0xff]
    %v168 = vld [vmem:[%s4 + $0x20] sm:$0xff]
    %v169 = vld [vmem:[%s4 + $0x28] sm:$0xff]
    %v170 = vld [vmem:[%s4 + $0x30] sm:$0xff]
    %v171 = vld [vmem:[%s4 + $0x38] sm:$0xff]
    %v172 = vld [vmem:[%s4 + $0x40] sm:$0xff]
    %v173 = vld [vmem:[%s4 + $0x48] sm:$0xff]
    %v174 = vld [vmem:[%s4 + $0x50] sm:$0xff]
    %v175 = vld [vmem:[%s4 + $0x58] sm:$0xff]
    %v176 = vld [vmem:[%s4 + $0x60] sm:$0xff]
    %v177 = vld [vmem:[%s4 + $0x68] sm:$0xff]
    %v178 = vld [vmem:[%s4 + $0x70] sm:$0xff]
    %v179 = vld [vmem:[%s4 + $0x78] sm:$0xff]
    %v180 = vld [vmem:[%s5] sm:$0x1]
    %v182 = vlaneseq
    %v183 = vshrl.u32 %v182, 7
    %v184 = vsub.s32 0, %v183
    %v185 = vrot.slane %v180, %v184
    %187 = vmatprep.subr.mxu0 0.0
    %188 = vmatpush1.msra.mxu0 %v179
    %189 = vmatprep.subr.mxu0 0.0
    %190 = vmatpush1.msra.mxu0 %v178
    %191 = vmatprep.subr.mxu0 0.0
    %192 = vmatpush1.msra.mxu0 %v177
    %193 = vmatprep.subr.mxu0 0.0
    %194 = vmatpush1.msra.mxu0 %v176
    %195 = vmatprep.subr.mxu0 0.0
    %196 = vmatpush1.msra.mxu0 %v175
    %197 = vmatprep.subr.mxu0 0.0
    %198 = vmatpush1.msra.mxu0 %v174
    %199 = vmatprep.subr.mxu0 0.0
    %200 = vmatpush1.msra.mxu0 %v173
    %201 = vmatprep.subr.mxu0 0.0
    %202 = vmatpush1.msra.mxu0 %v172
    %203 = vmatprep.subr.mxu0 0.0
    %204 = vmatpush1.msra.mxu0 %v171
    %205 = vmatprep.subr.mxu0 0.0
    %206 = vmatpush1.msra.mxu0 %v170
    %207 = vmatprep.subr.mxu0 0.0
    %208 = vmatpush1.msra.mxu0 %v169
    %209 = vmatprep.subr.mxu0 0.0
    %210 = vmatpush1.msra.mxu0 %v168
    %211 = vmatprep.subr.mxu0 0.0
    %212 = vmatpush1.msra.mxu0 %v167
    %213 = vmatprep.subr.mxu0 0.0
    %214 = vmatpush1.msra.mxu0 %v166
    %215 = vmatprep.subr.mxu0 0.0
    %216 = vmatpush1.msra.mxu0 %v165
    %217 = vmatprep.subr.mxu0 0.0
    %218 = vmatpush1.msra.mxu0 %v164
    %219 = vmatprep.subr.mxu0 0.0
    %220 = vmatpush2.msra.mxu0 0.0
    %221 = vmatprep.subr.mxu0 0.0
    %222 = vmatpush2.msra.mxu0 0.0
    %223 = vmatprep.subr.mxu0 0.0
    %224 = vmatpush2.msra.mxu0 0.0
    %225 = vmatprep.subr.mxu0 0.0
    %226 = vmatpush2.msra.mxu0 0.0
    %227 = vmatprep.subr.mxu0 0.0
    %228 = vmatpush2.msra.mxu0 0.0
    %229 = vmatprep.subr.mxu0 0.0
    %230 = vmatpush2.msra.mxu0 0.0
    %231 = vmatprep.subr.mxu0 0.0
    %232 = vmatpush2.msra.mxu0 0.0
    %233 = vmatprep.subr.mxu0 0.0
    %234 = vmatpush2.msra.mxu0 0.0
    %235 = vmatprep.subr.mxu0 0.0
    %236 = vmatpush2.msra.mxu0 0.0
    %237 = vmatprep.subr.mxu0 0.0
    %238 = vmatpush2.msra.mxu0 0.0
    %239 = vmatprep.subr.mxu0 0.0
    %240 = vmatpush2.msra.mxu0 0.0
    %241 = vmatprep.subr.mxu0 0.0
    %242 = vmatpush2.msra.mxu0 0.0
    %243 = vmatprep.subr.mxu0 0.0
    %244 = vmatpush2.msra.mxu0 0.0
    %245 = vmatprep.subr.mxu0 0.0
    %246 = vmatpush2.msra.mxu0 0.0
    %247 = vmatprep.subr.mxu0 0.0
    %248 = vmatpush2.msra.mxu0 0.0
    %249 = vmatprep.subr.mxu0 0.0
    %250 = vmatpush2.msra.mxu0 0.0
    %251 = vmatprep.mubr.f32.mxu0 0.0
    %252 = vmatmul.mubr.f32.gmra.mxu0 %v163
    %v253 = vpop.f32.mrf.mxu0
    %v254 = vadd.f32 %v185, %v253
    %v255 = vpop.f32.mrf.mxu0
    %256 = vdwg.mxu0
    %v257 = vmax.f32 %v254, 0.0
    %v258 = vld [vmem:[%s1] sm:$0xff]
    %v259 = vld [vmem:[%s6] sm:$0x1]
    %261 = vset.pattern.permute.xlu0 0
    %262 = vperm.xlu0 %261, %v258
    %v263 = vpop.permute.xlu0 %262
    %v266 = vlaneseq
    %v267 = vshrl.u32 %v266, 7
    %v268 = vsub.s32 0, %v267
    %v269 = vrot.slane %v259, %v268
    %v271 = vmul.f32 %v263, %v269
    %v272 = vld [vmem:[%s7] sm:$0x1]
    %v274 = vlaneseq
    %v275 = vshrl.u32 %v274, 7
    %v276 = vsub.s32 0, %v275
    %v277 = vrot.slane %v272, %v276
    %v279 = vadd.f32 %v271, %v277
    %v280 = vmax.f32 %v279, 0.0
    %v281 = vld [vmem:[%s8] sm:$0xff]
    %v282 = vld [vmem:[%s8 + $0x8] sm:$0xff]
    %v283 = vld [vmem:[%s9] sm:$0xff]
    %v284 = vld [vmem:[%s9 + $0x8] sm:$0xff]
    %vm285 = vcmask 130048
    %v287 = vsel %vm285, %v280, 0
    %289 = vmatprep.subr.mxu0 0.0
    %290 = vmatpush1.msra.mxu0 0.0
    %291 = vmatprep.subr.mxu0 0.0
    %292 = vmatpush1.msra.mxu0 0.0
    %293 = vmatprep.subr.mxu0 0.0
    %294 = vmatpush1.msra.mxu0 0.0
    %295 = vmatprep.subr.mxu0 0.0
    %296 = vmatpush1.msra.mxu0 0.0
    %297 = vmatprep.subr.mxu0 0.0
    %298 = vmatpush1.msra.mxu0 0.0
    %299 = vmatprep.subr.mxu0 0.0
    %300 = vmatpush1.msra.mxu0 0.0
    %301 = vmatprep.subr.mxu0 0.0
    %302 = vmatpush1.msra.mxu0 0.0
    %303 = vmatprep.subr.mxu0 0.0
    %304 = vmatpush1.msra.mxu0 0.0
    %305 = vmatprep.subr.mxu0 0.0
    %306 = vmatpush1.msra.mxu0 0.0
    %307 = vmatprep.subr.mxu0 0.0
    %308 = vmatpush1.msra.mxu0 0.0
    %309 = vmatprep.subr.mxu0 0.0
    %310 = vmatpush1.msra.mxu0 0.0
    %311 = vmatprep.subr.mxu0 0.0
    %312 = vmatpush1.msra.mxu0 0.0
    %313 = vmatprep.subr.mxu0 0.0
    %314 = vmatpush1.msra.mxu0 0.0
    %315 = vmatprep.subr.mxu0 0.0
    %316 = vmatpush1.msra.mxu0 0.0
    %317 = vmatprep.subr.mxu0 0.0
    %318 = vmatpush1.msra.mxu0 %v284
    %319 = vmatprep.subr.mxu0 0.0
    %320 = vmatpush1.msra.mxu0 %v283
    %321 = vmatprep.subr.mxu0 0.0
    %322 = vmatpush2.msra.mxu0 0.0
    %323 = vmatprep.subr.mxu0 0.0
    %324 = vmatpush2.msra.mxu0 0.0
    %325 = vmatprep.subr.mxu0 0.0
    %326 = vmatpush2.msra.mxu0 0.0
    %327 = vmatprep.subr.mxu0 0.0
    %328 = vmatpush2.msra.mxu0 0.0
    %329 = vmatprep.subr.mxu0 0.0
    %330 = vmatpush2.msra.mxu0 0.0
    %331 = vmatprep.subr.mxu0 0.0
    %332 = vmatpush2.msra.mxu0 0.0
    %333 = vmatprep.subr.mxu0 0.0
    %334 = vmatpush2.msra.mxu0 0.0
    %335 = vmatprep.subr.mxu0 0.0
    %336 = vmatpush2.msra.mxu0 0.0
    %337 = vmatprep.subr.mxu0 0.0
    %338 = vmatpush2.msra.mxu0 0.0
    %339 = vmatprep.subr.mxu0 0.0
    %340 = vmatpush2.msra.mxu0 0.0
    %341 = vmatprep.subr.mxu0 0.0
    %342 = vmatpush2.msra.mxu0 0.0
    %343 = vmatprep.subr.mxu0 0.0
    %344 = vmatpush2.msra.mxu0 0.0
    %345 = vmatprep.subr.mxu0 0.0
    %346 = vmatpush2.msra.mxu0 0.0
    %347 = vmatprep.subr.mxu0 0.0
    %348 = vmatpush2.msra.mxu0 0.0
    %349 = vmatprep.subr.mxu0 0.0
    %350 = vmatpush2.msra.mxu0 0.0
    %351 = vmatprep.subr.mxu0 0.0
    %352 = vmatpush2.msra.mxu0 0.0
    %353 = vmatprep.mubr.f32.mxu0 0.0
    %354 = vmatmul.mubr.f32.gmra.mxu0 %v287
    %v355 = vpop.f32.mrf.mxu0
    %v356 = vadd.f32 0.0, %v355
    %v357 = vpop.f32.mrf.mxu0
    %358 = vdwg.mxu0
    %v360 = vsel %vm285, %v257, 0
    %362 = vmatprep.subr.mxu0 0.0
    %363 = vmatpush1.msra.mxu0 0.0
    %364 = vmatprep.subr.mxu0 0.0
    %365 = vmatpush1.msra.mxu0 0.0
    %366 = vmatprep.subr.mxu0 0.0
    %367 = vmatpush1.msra.mxu0 0.0
    %368 = vmatprep.subr.mxu0 0.0
    %369 = vmatpush1.msra.mxu0 0.0
    %370 = vmatprep.subr.mxu0 0.0
    %371 = vmatpush1.msra.mxu0 0.0
    %372 = vmatprep.subr.mxu0 0.0
    %373 = vmatpush1.msra.mxu0 0.0
    %374 = vmatprep.subr.mxu0 0.0
    %375 = vmatpush1.msra.mxu0 0.0
    %376 = vmatprep.subr.mxu0 0.0
    %377 = vmatpush1.msra.mxu0 0.0
    %378 = vmatprep.subr.mxu0 0.0
    %379 = vmatpush1.msra.mxu0 0.0
    %380 = vmatprep.subr.mxu0 0.0
    %381 = vmatpush1.msra.mxu0 0.0
    %382 = vmatprep.subr.mxu0 0.0
    %383 = vmatpush1.msra.mxu0 0.0
    %384 = vmatprep.subr.mxu0 0.0
    %385 = vmatpush1.msra.mxu0 0.0
    %386 = vmatprep.subr.mxu0 0.0
    %387 = vmatpush1.msra.mxu0 0.0
    %388 = vmatprep.subr.mxu0 0.0
    %389 = vmatpush1.msra.mxu0 0.0
    %390 = vmatprep.subr.mxu0 0.0
    %391 = vmatpush1.msra.mxu0 %v282
    %392 = vmatprep.subr.mxu0 0.0
    %393 = vmatpush1.msra.mxu0 %v281
    %394 = vmatprep.subr.mxu0 0.0
    %395 = vmatpush2.msra.mxu0 0.0
    %396 = vmatprep.subr.mxu0 0.0
    %397 = vmatpush2.msra.mxu0 0.0
    %398 = vmatprep.subr.mxu0 0.0
    %399 = vmatpush2.msra.mxu0 0.0
    %400 = vmatprep.subr.mxu0 0.0
    %401 = vmatpush2.msra.mxu0 0.0
    %402 = vmatprep.subr.mxu0 0.0
    %403 = vmatpush2.msra.mxu0 0.0
    %404 = vmatprep.subr.mxu0 0.0
    %405 = vmatpush2.msra.mxu0 0.0
    %406 = vmatprep.subr.mxu0 0.0
    %407 = vmatpush2.msra.mxu0 0.0
    %408 = vmatprep.subr.mxu0 0.0
    %409 = vmatpush2.msra.mxu0 0.0
    %410 = vmatprep.subr.mxu0 0.0
    %411 = vmatpush2.msra.mxu0 0.0
    %412 = vmatprep.subr.mxu0 0.0
    %413 = vmatpush2.msra.mxu0 0.0
    %414 = vmatprep.subr.mxu0 0.0
    %415 = vmatpush2.msra.mxu0 0.0
    %416 = vmatprep.subr.mxu0 0.0
    %417 = vmatpush2.msra.mxu0 0.0
    %418 = vmatprep.subr.mxu0 0.0
    %419 = vmatpush2.msra.mxu0 0.0
    %420 = vmatprep.subr.mxu0 0.0
    %421 = vmatpush2.msra.mxu0 0.0
    %422 = vmatprep.subr.mxu0 0.0
    %423 = vmatpush2.msra.mxu0 0.0
    %424 = vmatprep.subr.mxu0 0.0
    %425 = vmatpush2.msra.mxu0 0.0
    %426 = vmatprep.mubr.f32.mxu0 0.0
    %427 = vmatmul.mubr.f32.gmra.mxu0 %v360
    %v428 = vpop.f32.mrf.mxu0
    %v429 = vadd.f32 %v356, %v428
    %v430 = vpop.f32.mrf.mxu0
    %431 = vdwg.mxu0
    %v432 = vld [vmem:[%s10] sm:$0x1]
    %v434 = vlaneseq
    %v435 = vshrl.u32 %v434, 7
    %v436 = vsub.s32 0, %v435
    %v437 = vrot.slane %v432, %v436
    %v439 = vadd.f32 %v429, %v437
    %440 = vst [vmem:[#allocation5] sm:$0xff] %v439
    // Predicated region
    $region50: #{tpu_custom_call.1} parent=1 // pred_check
      _
    $region51: #{tpu_custom_call.1} parent=1 // pred_check_branch
      %442 = sbr.rel (0) target = $region53
    $region52: #{tpu_custom_call.1} parent=1 // pred_region
      %s444 = ssub.s32 128, 128
      %445 = vsyncadd [#allocation4], %s444
      %s447 = sshll.u32 [#allocation5], 4
      %s448 = int_to_ptr.vmem [resolvable:$true] %s447
      %450 = dma.vmem_to_hbm [thread:$0]  %s448, 128, %s11, [#allocation4]
    $region53: #{tpu_custom_call.1} parent=1 // pred_fallthru
      _
    // Predicated region
    $region54: #{tpu_custom_call.1} parent=1 // pred_check
      _
    $region55: #{tpu_custom_call.1} parent=1 // pred_check_branch
      %452 = sbr.rel (0) target = $region57
    $region56: #{tpu_custom_call.1} parent=1 // pred_region
      %453 = dma.done [#allocation4], 128
    $region57: #{tpu_custom_call.1} parent=1 // pred_fallthru
      _
    %454 = vsyncpa [#allocation3], 1
    %455 = vsyncpa [#allocation4], 1

</llo_original>
